<compile_context>
chip_gen: v7x
topology: tpu7x:2x2x1
jax: 0.10.0
libtpu: 0.0.40
codegen_flags: <defaults>
</compile_context>

<pallas_src>
import functools

import jax
import jax.numpy as jnp
from jax.experimental import pallas as pl
from jax.experimental.pallas import tpu as pltpu

# torch.nn.functional.pairwise_distance default eps (added to the difference)
_EPS = 1e-6


def _contrastive_loss_kernel(out1_ref, out2_ref, label_ref, loss_ref, acc_ref,
                             *, margin, true_b, block_rows):
    pid = pl.program_id(0)
    nblk = pl.num_programs(0)

    @pl.when(pid == 0)
    def _init():
        acc_ref[...] = jnp.zeros_like(acc_ref)

    # In-kernel upcast: VMEM tiles hold the native dtype, arithmetic is f32.
    x1 = out1_ref[...].astype(jnp.float32)
    x2 = out2_ref[...].astype(jnp.float32)
    lab = label_ref[...].astype(jnp.float32)                      # (TB, 1)

    diff = x1 - x2 + _EPS                                         # torch eps-in-diff
    dist_sq = jnp.sum(diff * diff, axis=-1, keepdims=True)        # (TB, 1)
    dist = jnp.sqrt(dist_sq)                                      # only feeds hinge
    per_example = (1.0 - lab) * dist_sq + lab * jnp.maximum(margin - dist, 0.0)

    # Mask rows past the true batch size (last partial tile is zero-padded).
    row = jax.lax.broadcasted_iota(jnp.int32, per_example.shape, 0)
    valid = (pid * block_rows + row) < true_b
    per_example = jnp.where(valid, per_example, 0.0)

    acc_ref[...] += jnp.sum(per_example)

    @pl.when(pid == nblk - 1)
    def _finalize():
        loss_ref[...] = acc_ref[...] / jnp.float32(true_b)


def _pick_block_rows(B, D, itemsize, vmem_budget_bytes=16 * 1024 * 1024):
    """Largest multiple-of-8 tile whose 2 inputs x 2 pipeline buffers fit the budget.

    Budget kept at 16 MiB so the same sizing is safe on v7x (32 MiB scoped /
    64 MiB physical VMEM) as well as v5e/v6e.
    """
    bytes_per_row = 2 * 2 * D * itemsize
    tb = vmem_budget_bytes // max(bytes_per_row, 1)
    tb = max(8, (tb // 8) * 8)
    if tb >= B:
        return B          # single block == full array dim (always legal)
    return tb


def contrastive_loss(out1, out2, label, margin=1.0, block_rows=None):
    """JAX/Pallas equivalent of Contrastive_Loss.forward."""
    B, D = out1.shape
    label2 = label.reshape(B, 1).astype(jnp.float32)

    if block_rows is None:
        block_rows = _pick_block_rows(B, D, jnp.dtype(out1.dtype).itemsize)
    tb = int(block_rows)
    num_blocks = -(-B // tb)

    kernel = functools.partial(
        _contrastive_loss_kernel, margin=float(margin), true_b=B, block_rows=tb
    )
    loss = pl.pallas_call(
        kernel,
        out_shape=jax.ShapeDtypeStruct((1, 1), jnp.float32),
        grid_spec=pltpu.PrefetchScalarGridSpec(
            num_scalar_prefetch=0,
            grid=(num_blocks,),
            in_specs=[
                pl.BlockSpec((tb, D), lambda i: (i, 0)),
                pl.BlockSpec((tb, D), lambda i: (i, 0)),
                pl.BlockSpec((tb, 1), lambda i: (i, 0)),
            ],
            out_specs=pl.BlockSpec((1, 1), lambda i: (0, 0)),
            scratch_shapes=[pltpu.VMEM((1, 1), jnp.float32)],
        ),
        compiler_params=pltpu.CompilerParams(
            dimension_semantics=("arbitrary",),
        ),
    )(out1, out2, label2)
    return loss[0, 0]


def _reference_loss(out1, out2, label, margin=1.0):
    # Pure-JAX reference mirroring the torch semantics.
    diff = out1 - out2 + _EPS
    dist = jnp.sqrt(jnp.sum(diff * diff, axis=-1))
    return jnp.mean(
        (1.0 - label) * dist**2 + label * jnp.maximum(margin - dist, 0.0)
    )


if __name__ == "__main__":
    key = jax.random.PRNGKey(0)
    k1, k2, k3, k4, k5, k6 = jax.random.split(key, 6)

    # Small Siamese-style shapes: batch=8, embedding dim=32, f32 inputs.
    B, D = 8, 32
    out1 = jax.random.normal(k1, (B, D), dtype=jnp.float32)
    out2 = jax.random.normal(k2, (B, D), dtype=jnp.float32)
    label = jax.random.bernoulli(k3, p=0.5, shape=(B,)).astype(jnp.float32)

    loss = jax.block_until_ready(contrastive_loss(out1, out2, label, margin=1.0))
    ref = _reference_loss(out1, out2, label, margin=1.0)
    assert jnp.allclose(loss, ref, rtol=1e-5, atol=1e-5), (loss, ref)

    # Exercise the tiled + masked path: B not a multiple of the tile,
    # bf16 inputs (upcast to f32 happens inside the kernel).
    B2, D2 = 20, 128
    a = jax.random.normal(k4, (B2, D2), dtype=jnp.float32).astype(jnp.bfloat16)
    b = jax.random.normal(k5, (B2, D2), dtype=jnp.float32).astype(jnp.bfloat16)
    lab2 = jax.random.bernoulli(k6, p=0.5, shape=(B2,)).astype(jnp.float32)
    loss2 = jax.block_until_ready(
        contrastive_loss(a, b, lab2, margin=1.0, block_rows=8)
    )
    ref2 = _reference_loss(a.astype(jnp.float32), b.astype(jnp.float32), lab2, 1.0)
    assert jnp.allclose(loss2, ref2, rtol=1e-4, atol=1e-4), (loss2, ref2)

    print("KERNEL_OK")
</pallas_src>

<mosaic_0001>
module attributes {stable_mosaic.version = 11 : i64} {
  func.func @_contrastive_loss_kernel(%arg0: i32, %arg1: memref<8x32xf32, #tpu.memory_space<vmem>>, %arg2: memref<8x32xf32, #tpu.memory_space<vmem>>, %arg3: memref<8x1xf32, #tpu.memory_space<vmem>>, %arg4: memref<1x1xf32, #tpu.memory_space<vmem>>, %arg5: memref<1x1xf32, #tpu.memory_space<vmem>>) attributes {dimension_semantics = [#tpu.dimension_semantics<arbitrary>], iteration_bounds = array<i64: 1>, scalar_prefetch = 0 : i64, scratch_operands = 1 : i64, tpu.core_type = #tpu.core_type<tc>, window_params = [{transform_indices = @transform_0, window_bounds = array<i64: 8, 32>}, {transform_indices = @transform_1, window_bounds = array<i64: 8, 32>}, {transform_indices = @transform_2, window_bounds = array<i64: 8, 1>}, {pipeline_mode = #tpu.pipeline_mode<synchronous>, transform_indices = @transform_3, window_bounds = array<i64: 1, 1>}]} {
    %c0_i32 = arith.constant 0 : i32
    %0 = arith.cmpi eq, %arg0, %c0_i32 : i32
    %1 = arith.extui %0 : i1 to i32
    %c0_i32_0 = arith.constant 0 : i32
    %2 = arith.cmpi ne, %1, %c0_i32_0 : i32
    scf.if %2 {
      %cst_19 = arith.constant 0.000000e+00 : f32
      %41 = vector.broadcast %cst_19 : f32 to vector<1x1xf32>
      %c0_20 = arith.constant 0 : index
      %c0_21 = arith.constant 0 : index
      %42 = vector.load %arg5[%c0_20, %c0_21] : memref<1x1xf32, #tpu.memory_space<vmem>>, vector<1x1xf32>
      tpu.vector_store %arg5[%c0_20, %c0_21], %41 {strides = array<i32>} : memref<1x1xf32, #tpu.memory_space<vmem>>, vector<1x1xf32>,
    } else {
    }
    %c0 = arith.constant 0 : index
    %c0_1 = arith.constant 0 : index
    %3 = vector.load %arg1[%c0, %c0_1] : memref<8x32xf32, #tpu.memory_space<vmem>>, vector<8x32xf32>
    %c0_2 = arith.constant 0 : index
    %c0_3 = arith.constant 0 : index
    %4 = vector.load %arg2[%c0_2, %c0_3] : memref<8x32xf32, #tpu.memory_space<vmem>>, vector<8x32xf32>
    %c0_4 = arith.constant 0 : index
    %c0_5 = arith.constant 0 : index
    %5 = vector.load %arg3[%c0_4, %c0_5] : memref<8x1xf32, #tpu.memory_space<vmem>>, vector<8x1xf32>
    %6 = arith.subf %3, %4 : vector<8x32xf32>
    %cst = arith.constant 9.99999997E-7 : f32
    %7 = vector.broadcast %cst : f32 to vector<8x32xf32>
    %8 = arith.addf %6, %7 : vector<8x32xf32>
    %9 = arith.mulf %8, %8 : vector<8x32xf32>
    %cst_6 = arith.constant dense<0.000000e+00> : vector<8xf32>
    %10 = vector.multi_reduction <add>, %9, %cst_6 [1] : vector<8x32xf32> to vector<8xf32>
    %11 = vector.shape_cast %10 : vector<8xf32> to vector<8x1xf32>
    %12 = math.sqrt %11 : vector<8x1xf32>
    %cst_7 = arith.constant 1.000000e+00 : f32
    %13 = vector.broadcast %cst_7 : f32 to vector<8x1xf32>
    %14 = arith.subf %13, %5 : vector<8x1xf32>
    %15 = arith.mulf %14, %11 : vector<8x1xf32>
    %cst_8 = arith.constant 1.000000e+00 : f32
    %16 = vector.broadcast %cst_8 : f32 to vector<8x1xf32>
    %17 = arith.subf %16, %12 : vector<8x1xf32>
    %cst_9 = arith.constant 0.000000e+00 : f32
    %18 = vector.broadcast %cst_9 : f32 to vector<8x1xf32>
    %19 = arith.maximumf %17, %18 : vector<8x1xf32>
    %20 = arith.mulf %5, %19 : vector<8x1xf32>
    %21 = arith.addf %15, %20 : vector<8x1xf32>
    %22 = tpu.iota {dimensions = array<i32: 0>} : vector<8x1xi32>
    %c8_i32 = arith.constant 8 : i32
    %23 = arith.muli %arg0, %c8_i32 : i32
    %24 = vector.broadcast %23 : i32 to vector<8x1xi32>
    %25 = arith.addi %24, %22 : vector<8x1xi32>
    %c8_i32_10 = arith.constant 8 : i32
    %26 = vector.broadcast %c8_i32_10 : i32 to vector<8x1xi32>
    %27 = arith.cmpi slt, %25, %26 : vector<8x1xi32>
    %cst_11 = arith.constant 0.000000e+00 : f32
    %28 = vector.broadcast %cst_11 : f32 to vector<8x1xf32>
    %29 = arith.select %27, %21, %28 : vector<8x1xi1>, vector<8x1xf32>
    %c0_12 = arith.constant 0 : index
    %c0_13 = arith.constant 0 : index
    %30 = vector.load %arg5[%c0_12, %c0_13] : memref<1x1xf32, #tpu.memory_space<vmem>>, vector<1x1xf32>
    %31 = vector.shape_cast %29 : vector<8x1xf32> to vector<1x8x1xf32>
    %cst_14 = arith.constant dense<0.000000e+00> : vector<1xf32>
    %32 = vector.multi_reduction <add>, %31, %cst_14 [1, 2] : vector<1x8x1xf32> to vector<1xf32>
    %33 = vector.shape_cast %32 : vector<1xf32> to vector<1x1x1xf32>
    %34 = vector.extract %33[0, 0, 0] : f32 from vector<1x1x1xf32>
    %35 = vector.broadcast %34 : f32 to vector<1x1xf32>
    %36 = arith.addf %30, %35 : vector<1x1xf32>
    %c0_15 = arith.constant 0 : index
    %c0_16 = arith.constant 0 : index
    %37 = vector.load %arg5[%c0_15, %c0_16] : memref<1x1xf32, #tpu.memory_space<vmem>>, vector<1x1xf32>
    tpu.vector_store %arg5[%c0_15, %c0_16], %36 {strides = array<i32>} : memref<1x1xf32, #tpu.memory_space<vmem>>, vector<1x1xf32>,
    %c0_i32_17 = arith.constant 0 : i32
    %38 = arith.cmpi eq, %arg0, %c0_i32_17 : i32
    %39 = arith.extui %38 : i1 to i32
    %c0_i32_18 = arith.constant 0 : i32
    %40 = arith.cmpi ne, %39, %c0_i32_18 : i32
    scf.if %40 {
      %c0_19 = arith.constant 0 : index
      %c0_20 = arith.constant 0 : index
      %41 = vector.load %arg5[%c0_19, %c0_20] : memref<1x1xf32, #tpu.memory_space<vmem>>, vector<1x1xf32>
      %cst_21 = arith.constant 8.000000e+00 : f32
      %42 = vector.broadcast %cst_21 : f32 to vector<1x1xf32>
      %43 = arith.divf %41, %42 : vector<1x1xf32>
      %c0_22 = arith.constant 0 : index
      %c0_23 = arith.constant 0 : index
      %44 = vector.load %arg4[%c0_22, %c0_23] : memref<1x1xf32, #tpu.memory_space<vmem>>, vector<1x1xf32>
      tpu.vector_store %arg4[%c0_22, %c0_23], %43 {strides = array<i32>} : memref<1x1xf32, #tpu.memory_space<vmem>>, vector<1x1xf32>,
    } else {
    }
    return
  }
  func.func @transform_0(%arg0: i32) -> (i32, i32) {
    %c0_i32 = arith.constant 0 : i32
    %c0_i32_0 = arith.constant 0 : i32
    return %arg0, %c0_i32 : i32, i32
  }
  func.func @transform_1(%arg0: i32) -> (i32, i32) {
    %c0_i32 = arith.constant 0 : i32
    %c0_i32_0 = arith.constant 0 : i32
    return %arg0, %c0_i32 : i32, i32
  }
  func.func @transform_2(%arg0: i32) -> (i32, i32) {
    %c0_i32 = arith.constant 0 : i32
    %c0_i32_0 = arith.constant 0 : i32
    return %arg0, %c0_i32 : i32, i32
  }
  func.func @transform_3(%arg0: i32) -> (i32, i32) {
    %c0_i32 = arith.constant 0 : i32
    %c0_i32_0 = arith.constant 0 : i32
    %c0_i32_1 = arith.constant 0 : i32
    return %c0_i32, %c0_i32_0 : i32, i32
  }
}

</mosaic_0001>

<llo_original>
// kernel: tpu_custom_call.1
$region0: #{tpu_custom_call.1}
  #allocation0 [shape = 'u32[]', space=smem, size = 0x4, offset = 0x4, fixed_abs, tag = 'smem constant byte address 0x4 - core index']
  #allocation1 [shape = 'u32[144,128]{1,0:T(1,128)}', space=vmem, size = 0x12000, scoped, tag = 'internal scratch']
  #allocation2 [shape = 'f32[1,1]{1,0:T(1,128)}', space=vmem, size = 0x200, scoped, tag = 'scratch operand']
  %s0 = inlined_call_operand.vmem [shape: f32[8,32], index: 0, kind: input, shape index: {}]
  %s1 = inlined_call_operand.hbm [shape: f32[8,32], index: 1, kind: input, shape index: {}]
  %s2 = inlined_call_operand.vmem [shape: f32[8,1], index: 2, kind: input, shape index: {}]
  %s3 = inlined_call_operand.hbm [shape: f32[1,1], index: 3, kind: output, shape index: {}]
  %s4 = sld [smem:[#allocation0]]
  $region34: #{tpu_custom_call.1} parent=0
    _
  %s6 = ssub.s32 1, %s4
  %s7 = scalar_select 0, %s6, %s4
  $region1: #{tpu_custom_call.1} parent=0
    #allocation3 [shape = 'u8[4096]{0}', space=vmem, size = 0x1000, scoped, tag = 'input window, operand 1, single buffered']
    #allocation4 [shape = 's32[1]{0}', space=sflag, size = 0x4, scoped, tag = 'scoped memory for tpu_custom_call.1']
    #allocation5 [shape = 's32[1]{0}', space=sflag, size = 0x4, scoped, tag = 'scoped memory for tpu_custom_call.1']
    #allocation6 [shape = 'u8[512]{0}', space=vmem, size = 0x400, scoped, tag = 'output window, operand 0, single buffered']
    %8 = vsyncpa [#allocation4], 0
    %9 = vsyncpa [#allocation5], 0
    // Predicated region
    $region2: #{tpu_custom_call.1} parent=1 // pred_check
      _
    $region3: #{tpu_custom_call.1} parent=1 // pred_check_branch
      %11 = sbr.rel (0) target = $region5
    $region4: #{tpu_custom_call.1} parent=1 // pred_region
      _
    $region5: #{tpu_custom_call.1} parent=1 // pred_fallthru
      _
    // Predicated region
    $region6: #{tpu_custom_call.1} parent=1 // pred_check
      _
    $region7: #{tpu_custom_call.1} parent=1 // pred_check_branch
      %13 = sbr.rel (0) target = $region9
    $region8: #{tpu_custom_call.1} parent=1 // pred_region
      %s15 = ssub.s32 128, 128
      %16 = vsyncadd [#allocation4], %s15
      %s18 = sshll.u32 [#allocation3], 4
      %s19 = int_to_ptr.vmem [resolvable:$true] %s18
      %21 = dma.hbm_to_vmem [thread:$0]  %s1, 128, %s19, [#allocation4]
    $region9: #{tpu_custom_call.1} parent=1 // pred_fallthru
      _
    // Predicated region
    $region10: #{tpu_custom_call.1} parent=1 // pred_check
      _
    $region11: #{tpu_custom_call.1} parent=1 // pred_check_branch
      %23 = sbr.rel (0) target = $region13
    $region12: #{tpu_custom_call.1} parent=1 // pred_region
      _
    $region13: #{tpu_custom_call.1} parent=1 // pred_fallthru
      _
    // Predicated region
    $region14: #{tpu_custom_call.1} parent=1 // pred_check
      _
    $region15: #{tpu_custom_call.1} parent=1 // pred_check_branch
      %25 = sbr.rel (0) target = $region17
    $region16: #{tpu_custom_call.1} parent=1 // pred_region
      %26 = dma.done [#allocation4], 128
    $region17: #{tpu_custom_call.1} parent=1 // pred_fallthru
      _
    %p27 = scmp.eq.s32.totalorder 0, 0
    // Predicated region
    $region18: #{tpu_custom_call.1} parent=1 // pred_check
      %p28 = pneg %p27
    $region19: #{tpu_custom_call.1} parent=1 // pred_check_branch
      %30 = sbr.rel (%p28) target = $region21
    $region20: #{tpu_custom_call.1} parent=1 // pred_region
      %vm31 = vcmask 0
      %32 = vst.msk [vmem:[#allocation2] sm:$0x1] %vm31, 0.0
    $region21: #{tpu_custom_call.1} parent=1 // pred_fallthru
      _
    %v33 = vld [vmem:[%s0] sm:$0xff]
    %v34 = vld [vmem:[#allocation3] sm:$0xff]
    %v35 = vld [vmem:[%s2] sm:$0xff]
    %v36 = vsub.f32 %v33, %v34
    %v37 = vadd.f32 %v36, 1e-06
    %v38 = vmul.f32 %v37, %v37
    %vm39 = vcmask 261120
    %v40 = vsel %vm39, %v38, 0.0
    %41 = vadd.xlane.f32.xlu0 %v40
    %v42 = vpop.xlane.xlu0 %41
    %v43 = vrsqrt.pop %v42
    %v44 = vmul.f32 %v42, %v43
    %vm45 = vcmp.eq.f32.partialorder %v42, inf
    %v46 = vsel %vm45, %v42, %v44
    %vm47 = vcmp.eq.f32.partialorder %v42, 0.0
    %v48 = vand.u32 %v42, 2147483648
    %v49 = vsel %vm47, %v48, %v46
    %v50 = vsub.f32 1.0, %v35
    %v51 = vmul.f32 %v50, %v42
    %v52 = vsub.f32 1.0, %v49
    %v53 = vmax.f32 %v52, 0.0
    %v54 = vmul.f32 %v35, %v53
    %v55 = vadd.f32 %v51, %v54
    %v56 = vlaneseq
    %v57 = vshrl.u32 %v56, 7
    %s58 = smul.u32 0, 8
    %v59 = vstv %s58
    %v60 = vadd.s32 %v59, %v57
    %vm61 = vcmp.lt.s32.totalorder %v60, 8
    %v62 = vsel %vm61, %v55, 0.0
    %v63 = vld [vmem:[#allocation2] sm:$0x1]
    %vm64 = vcmask 7168
    %v65 = vsel %vm64, %v62, 0.0
    %66 = vadd.xlane.f32.xlu0 %v65
    %v67 = vpop.xlane.xlu0 %66
    %v68 = vrot.slane %v67, 4
    %v69 = vadd.f32 %v67, %v68
    %v70 = vrot.slane %v69, 2
    %v71 = vadd.f32 %v69, %v70
    %v72 = vrot.slane %v71, 1
    %v73 = vadd.f32 %v71, %v72
    %s74 = vtos %v73
    %v75 = vstv %s74
    %v76 = vadd.f32 %v63, %v75
    %vm77 = vcmask 0
    %78 = vst.msk [vmem:[#allocation2] sm:$0x1] %vm77, %v76
    // Predicated region
    $region22: #{tpu_custom_call.1} parent=1 // pred_check
      %p79 = pneg %p27
    $region23: #{tpu_custom_call.1} parent=1 // pred_check_branch
      %81 = sbr.rel (%p79) target = $region25
    $region24: #{tpu_custom_call.1} parent=1 // pred_region
      %v82 = vld [vmem:[#allocation2] sm:$0x1]
      %v83 = vrcp.pop 8.0
      %v84 = vmul.f32 %v82, %v83
      %85 = vst.msk [vmem:[#allocation6] sm:$0x1] %vm77, %v84
    $region25: #{tpu_custom_call.1} parent=1 // pred_fallthru
      _
    // Predicated region
    $region26: #{tpu_custom_call.1} parent=1 // pred_check
      _
    $region27: #{tpu_custom_call.1} parent=1 // pred_check_branch
      %87 = sbr.rel (0) target = $region29
    $region28: #{tpu_custom_call.1} parent=1 // pred_region
      %s89 = ssub.s32 16, 16
      %90 = vsyncadd [#allocation5], %s89
      %s92 = sshll.u32 [#allocation6], 4
      %s93 = int_to_ptr.vmem [resolvable:$true] %s92
      %95 = dma.vmem_to_hbm [thread:$0]  %s93, 16, %s3, [#allocation5]
    $region29: #{tpu_custom_call.1} parent=1 // pred_fallthru
      _
    // Predicated region
    $region30: #{tpu_custom_call.1} parent=1 // pred_check
      _
    $region31: #{tpu_custom_call.1} parent=1 // pred_check_branch
      %97 = sbr.rel (0) target = $region33
    $region32: #{tpu_custom_call.1} parent=1 // pred_region
      %98 = dma.done [#allocation5], 16
    $region33: #{tpu_custom_call.1} parent=1 // pred_fallthru
      _
    %99 = vsyncpa [#allocation4], 1
    %100 = vsyncpa [#allocation5], 1

</llo_original>
